<compile_context>
chip_gen: v5e
topology: v5e:2x2
jax: 0.10.0
libtpu: 0.0.40
codegen_flags: <defaults>
</compile_context>

<pallas_src>
import jax
import jax.numpy as jnp
from jax import lax
from jax.experimental import pallas as pl
from jax.experimental.pallas import tpu as pltpu

IN_FEATURES = 3 * 32 * 32   # 3072
OUT_FEATURES = 64
BATCH = 1


def linear_add_kernel(x_ref, w_ref, b_ref, other_ref, o_ref):
    # x_ref:     (B, K) f32   -> cast to bf16 in-kernel (free on the VPU)
    # w_ref:     (N, K) bf16  lane-dense PyTorch layout
    # b_ref:     (1, N) f32
    # other_ref: (B, N) f32
    # o_ref:     (B, N) f32
    x_bf16 = x_ref[...].astype(jnp.bfloat16)
    acc = lax.dot_general(
        x_bf16, w_ref[...],
        dimension_numbers=(((1,), (1,)), ((), ())),   # contract K with K
        preferred_element_type=jnp.float32,
    )
    o_ref[...] = (acc + b_ref[...] + other_ref[...]).astype(o_ref.dtype)


def linear_add(x, w_nk_bf16, bias2d, other):
    """x: (B, K) f32, w_nk_bf16: (N, K) bf16 (PyTorch layout, cast once at
    init), bias2d: (1, N) f32, other: (B, N) f32.  Returns (B, N) f32."""
    B, K = x.shape
    N, _ = w_nk_bf16.shape

    cost = pl.CostEstimate(
        flops=2 * B * K * N,
        transcendentals=0,
        bytes_accessed=(B * K * 4          # f32 x
                        + N * K * 2        # bf16 lane-dense weight (no pad)
                        + N * 4            # f32 bias
                        + B * N * 4        # f32 other
                        + B * N * 4),      # f32 output
    )

    return pl.pallas_call(
        linear_add_kernel,
        out_shape=jax.ShapeDtypeStruct((B, N), jnp.float32),
        grid_spec=pltpu.PrefetchScalarGridSpec(
            num_scalar_prefetch=0,
            grid=(1,),
            in_specs=[
                pl.BlockSpec((B, K), lambda i: (0, 0)),   # x
                pl.BlockSpec((N, K), lambda i: (0, 0)),   # weight (N, K)
                pl.BlockSpec((1, N), lambda i: (0, 0)),   # bias
                pl.BlockSpec((B, N), lambda i: (0, 0)),   # other
            ],
            out_specs=pl.BlockSpec((B, N), lambda i: (0, 0)),
        ),
        compiler_params=pltpu.CompilerParams(
            dimension_semantics=("arbitrary",),
        ),
        cost_estimate=cost,
    )(x, w_nk_bf16, bias2d, other)


if __name__ == "__main__":
    key = jax.random.PRNGKey(0)
    kx, ko, kw, kb = jax.random.split(key, 4)

    # Inputs (match the PyTorch module's shapes).
    x = jax.random.normal(kx, (BATCH, IN_FEATURES), dtype=jnp.float32)
    other = jax.random.normal(ko, (BATCH, OUT_FEATURES), dtype=jnp.float32)

    # Linear parameters, PyTorch-style uniform init bound and PyTorch-native
    # (out_features, in_features) weight layout — which is also the TPU
    # lane-dense layout.  Cast to bf16 ONCE here (init-time), never per call.
    bound = 1.0 / jnp.sqrt(jnp.float32(IN_FEATURES))
    w_nk = jax.random.uniform(
        kw, (OUT_FEATURES, IN_FEATURES), minval=-bound, maxval=bound,
        dtype=jnp.float32)
    bias = jax.random.uniform(
        kb, (OUT_FEATURES,), minval=-bound, maxval=bound, dtype=jnp.float32)

    w_nk_bf16 = w_nk.astype(jnp.bfloat16)                    # init-time cast
    bias2d = bias.reshape(1, OUT_FEATURES).astype(jnp.float32)

    out = linear_add(x, w_nk_bf16, bias2d, other)
    out = jax.block_until_ready(out)

    # Reference in plain JAX using the same bf16-rounded matmul inputs
    # (f32 accumulation on both sides) so tolerances stay tight.
    x_bf = x.astype(jnp.bfloat16).astype(jnp.float32)
    w_bf = w_nk_bf16.astype(jnp.float32)
    ref = x_bf @ w_bf.T + bias[None, :] + other

    assert out.shape == (BATCH, OUT_FEATURES)
    assert out.dtype == jnp.float32
    assert jnp.allclose(out, ref, atol=1e-2, rtol=1e-2)

    print("KERNEL_OK")
</pallas_src>

<mosaic_0001>
module attributes {stable_mosaic.version = 11 : i64} {
  func.func @linear_add_kernel(%arg0: i32, %arg1: memref<1x3072xf32, #tpu.memory_space<vmem>>, %arg2: memref<64x3072xbf16, #tpu.memory_space<vmem>>, %arg3: memref<1x64xf32, #tpu.memory_space<vmem>>, %arg4: memref<1x64xf32, #tpu.memory_space<vmem>>, %arg5: memref<1x64xf32, #tpu.memory_space<vmem>>) attributes {dimension_semantics = [#tpu.dimension_semantics<arbitrary>], iteration_bounds = array<i64: 1>, scalar_prefetch = 0 : i64, scratch_operands = 0 : i64, tpu.core_type = #tpu.core_type<tc>, window_params = [{pipeline_mode = #tpu.pipeline_mode<synchronous>, transform_indices = @transform_0, window_bounds = array<i64: 1, 3072>}, {pipeline_mode = #tpu.pipeline_mode<synchronous>, transform_indices = @transform_1, window_bounds = array<i64: 64, 3072>}, {pipeline_mode = #tpu.pipeline_mode<synchronous>, transform_indices = @transform_2, window_bounds = array<i64: 1, 64>}, {pipeline_mode = #tpu.pipeline_mode<synchronous>, transform_indices = @transform_3, window_bounds = array<i64: 1, 64>}, {pipeline_mode = #tpu.pipeline_mode<synchronous>, transform_indices = @transform_4, window_bounds = array<i64: 1, 64>}]} {
    %c0 = arith.constant 0 : index
    %c0_0 = arith.constant 0 : index
    %0 = vector.load %arg1[%c0, %c0_0] : memref<1x3072xf32, #tpu.memory_space<vmem>>, vector<1x3072xf32>
    %1 = arith.truncf %0 : vector<1x3072xf32> to vector<1x3072xbf16>
    %c0_1 = arith.constant 0 : index
    %c0_2 = arith.constant 0 : index
    %2 = vector.load %arg2[%c0_1, %c0_2] : memref<64x3072xbf16, #tpu.memory_space<vmem>>, vector<64x3072xbf16>
    %cst = arith.constant dense<0.000000e+00> : vector<1x64xf32>
    %3 = tpu.matmul %1, %2, %cst {dimension_numbers = #tpu.dot_dimension_numbers<[1], [1], [0], [0], [0, 0, 1, 0], [], []>} : vector<1x3072xbf16>, vector<64x3072xbf16>, vector<1x64xf32> -> vector<1x64xf32>
    %c0_3 = arith.constant 0 : index
    %c0_4 = arith.constant 0 : index
    %4 = vector.load %arg3[%c0_3, %c0_4] : memref<1x64xf32, #tpu.memory_space<vmem>>, vector<1x64xf32>
    %5 = arith.addf %3, %4 : vector<1x64xf32>
    %c0_5 = arith.constant 0 : index
    %c0_6 = arith.constant 0 : index
    %6 = vector.load %arg4[%c0_5, %c0_6] : memref<1x64xf32, #tpu.memory_space<vmem>>, vector<1x64xf32>
    %7 = arith.addf %5, %6 : vector<1x64xf32>
    %c0_7 = arith.constant 0 : index
    %c0_8 = arith.constant 0 : index
    %8 = vector.load %arg5[%c0_7, %c0_8] : memref<1x64xf32, #tpu.memory_space<vmem>>, vector<1x64xf32>
    tpu.vector_store %arg5[%c0_7, %c0_8], %7 {strides = array<i32>} : memref<1x64xf32, #tpu.memory_space<vmem>>, vector<1x64xf32>,
    return
  }
  func.func @transform_0(%arg0: i32) -> (i32, i32) {
    %c0_i32 = arith.constant 0 : i32
    %c0_i32_0 = arith.constant 0 : i32
    %c0_i32_1 = arith.constant 0 : i32
    return %c0_i32, %c0_i32_0 : i32, i32
  }
  func.func @transform_1(%arg0: i32) -> (i32, i32) {
    %c0_i32 = arith.constant 0 : i32
    %c0_i32_0 = arith.constant 0 : i32
    %c0_i32_1 = arith.constant 0 : i32
    return %c0_i32, %c0_i32_0 : i32, i32
  }
  func.func @transform_2(%arg0: i32) -> (i32, i32) {
    %c0_i32 = arith.constant 0 : i32
    %c0_i32_0 = arith.constant 0 : i32
    %c0_i32_1 = arith.constant 0 : i32
    return %c0_i32, %c0_i32_0 : i32, i32
  }
  func.func @transform_3(%arg0: i32) -> (i32, i32) {
    %c0_i32 = arith.constant 0 : i32
    %c0_i32_0 = arith.constant 0 : i32
    %c0_i32_1 = arith.constant 0 : i32
    return %c0_i32, %c0_i32_0 : i32, i32
  }
  func.func @transform_4(%arg0: i32) -> (i32, i32) {
    %c0_i32 = arith.constant 0 : i32
    %c0_i32_0 = arith.constant 0 : i32
    %c0_i32_1 = arith.constant 0 : i32
    return %c0_i32, %c0_i32_0 : i32, i32
  }
}

</mosaic_0001>

<llo_original>
// kernel: tpu_custom_call.1
$region0: #{tpu_custom_call.1}
  #allocation0 [shape = 'u32[]', space=smem, size = 0x4, offset = 0x4, fixed_abs, tag = 'smem constant byte address 0x4 - core index']
  #allocation1 [shape = 'u32[72,128]{1,0:T(1,128)}', space=vmem, size = 0x9000, scoped, tag = 'internal scratch']
  %s0 = inlined_call_operand.hbm [shape: f32[1,3072], index: 0, kind: input, shape index: {}]
  %s1 = inlined_call_operand.hbm [shape: bf16[64,3072], index: 1, kind: input, shape index: {}]
  %s2 = inlined_call_operand.vmem [shape: f32[1,64], index: 2, kind: input, shape index: {}]
  %s3 = inlined_call_operand.vmem [shape: f32[1,64], index: 3, kind: input, shape index: {}]
  %s4 = inlined_call_operand.hbm [shape: f32[1,64], index: 4, kind: output, shape index: {}]
  %s5 = sld [smem:[#allocation0]]
  $region34: #{tpu_custom_call.1} parent=0
    _
  %s7 = ssub.s32 1, %s5
  %s8 = scalar_select 0, %s7, %s5
  $region1: #{tpu_custom_call.1} parent=0
    #allocation2 [shape = 'u8[12288]{0}', space=vmem, size = 0x3000, scoped, tag = 'input window, operand 0, single buffered']
    #allocation3 [shape = 's32[1]{0}', space=sflag, size = 0x4, scoped, tag = 'scoped memory for tpu_custom_call.1']
    #allocation4 [shape = 's32[1]{0}', space=sflag, size = 0x4, scoped, tag = 'scoped memory for tpu_custom_call.1']
    #allocation5 [shape = 'u8[393216]{0}', space=vmem, size = 0x60000, scoped, tag = 'input window, operand 1, single buffered']
    #allocation6 [shape = 's32[1]{0}', space=sflag, size = 0x4, scoped, tag = 'scoped memory for tpu_custom_call.1']
    #allocation7 [shape = 'u8[512]{0}', space=vmem, size = 0x400, scoped, tag = 'output window, operand 0, single buffered']
    %9 = vsyncpa [#allocation3], 0
    %10 = vsyncpa [#allocation6], 0
    %11 = vsyncpa [#allocation4], 0
    // Predicated region
    $region2: #{tpu_custom_call.1} parent=1 // pred_check
      _
    $region3: #{tpu_custom_call.1} parent=1 // pred_check_branch
      %13 = sbr.rel (0) target = $region5
    $region4: #{tpu_custom_call.1} parent=1 // pred_region
      %15 = vsyncadd [#allocation3], 0
      %s17 = sshll.u32 %s0, 4
      %s18 = int_to_ptr.hbm [resolvable:$true] %s17
      %s19 = sshll.u32 [#allocation2], 4
      %s20 = int_to_ptr.vmem [resolvable:$true] %s19
      %22 = dma.hbm_to_vmem [thread:$0]  %s18, 384, %s20, [#allocation3]
    $region5: #{tpu_custom_call.1} parent=1 // pred_fallthru
      _
    // Predicated region
    $region6: #{tpu_custom_call.1} parent=1 // pred_check
      _
    $region7: #{tpu_custom_call.1} parent=1 // pred_check_branch
      %24 = sbr.rel (0) target = $region9
    $region8: #{tpu_custom_call.1} parent=1 // pred_region
      %26 = vsyncadd [#allocation6], 0
      %s27 = sshll.u32 %s1, 4
      %s28 = int_to_ptr.hbm [resolvable:$true] %s27
      %s29 = sshll.u32 [#allocation5], 4
      %s30 = int_to_ptr.vmem [resolvable:$true] %s29
      %35 = dma.hbm_to_vmem [thread:$0]  %s28, 12288, %s30, [#allocation6], 1536, 1536, 96
    $region9: #{tpu_custom_call.1} parent=1 // pred_fallthru
      _
    // Predicated region
    $region10: #{tpu_custom_call.1} parent=1 // pred_check
      _
    $region11: #{tpu_custom_call.1} parent=1 // pred_check_branch
      %37 = sbr.rel (0) target = $region13
    $region12: #{tpu_custom_call.1} parent=1 // pred_region
      _
    $region13: #{tpu_custom_call.1} parent=1 // pred_fallthru
      _
    // Predicated region
    $region14: #{tpu_custom_call.1} parent=1 // pred_check
      _
    $region15: #{tpu_custom_call.1} parent=1 // pred_check_branch
      %39 = sbr.rel (0) target = $region17
    $region16: #{tpu_custom_call.1} parent=1 // pred_region
      _
    $region17: #{tpu_custom_call.1} parent=1 // pred_fallthru
      _
    // Predicated region
    $region18: #{tpu_custom_call.1} parent=1 // pred_check
      _
    $region19: #{tpu_custom_call.1} parent=1 // pred_check_branch
      %41 = sbr.rel (0) target = $region21
    $region20: #{tpu_custom_call.1} parent=1 // pred_region
      %43 = dma.done [#allocation3], 384
    $region21: #{tpu_custom_call.1} parent=1 // pred_fallthru
      _
    // Predicated region
    $region22: #{tpu_custom_call.1} parent=1 // pred_check
      _
    $region23: #{tpu_custom_call.1} parent=1 // pred_check_branch
      %45 = sbr.rel (0) target = $region25
    $region24: #{tpu_custom_call.1} parent=1 // pred_region
      %47 = dma.done [#allocation6], 12288
    $region25: #{tpu_custom_call.1} parent=1 // pred_fallthru
      _
    %v49 = vld [vmem:[#allocation2] sm:$0xff]
    %v50 = vld [vmem:[#allocation2 + $0x8] sm:$0xff]
    %v51 = vld [vmem:[#allocation2 + $0x10] sm:$0xff]
    %v55 = vperm.slane %v49, 0
    %v56 = vperm.slane %v49, 1
    %v57 = vperm.slane %v49, 2
    %v58 = vperm.slane %v49, 3
    %v59 = vperm.slane %v49, 4
    %v60 = vperm.slane %v49, 5
    %v61 = vperm.slane %v49, 6
    %v62 = vperm.slane %v49, 7
    %v63 = vperm.slane %v50, 0
    %v64 = vperm.slane %v50, 1
    %v65 = vperm.slane %v50, 2
    %v66 = vperm.slane %v50, 3
    %v67 = vperm.slane %v50, 4
    %v68 = vperm.slane %v50, 5
    %v69 = vperm.slane %v50, 6
    %v70 = vperm.slane %v50, 7
    %v71 = vperm.slane %v51, 0
    %v72 = vperm.slane %v51, 1
    %v73 = vperm.slane %v51, 2
    %v74 = vperm.slane %v51, 3
    %v75 = vperm.slane %v51, 4
    %v76 = vperm.slane %v51, 5
    %v77 = vperm.slane %v51, 6
    %v78 = vperm.slane %v51, 7
    %v103 = vpack.c.bf16 %v55, %v55
    %v104 = vpack.c.bf16 %v56, %v56
    %v105 = vpack.c.bf16 %v57, %v57
    %v106 = vpack.c.bf16 %v58, %v58
    %v107 = vpack.c.bf16 %v59, %v59
    %v108 = vpack.c.bf16 %v60, %v60
    %v109 = vpack.c.bf16 %v61, %v61
    %v110 = vpack.c.bf16 %v62, %v62
    %v111 = vpack.c.bf16 %v63, %v63
    %v112 = vpack.c.bf16 %v64, %v64
    %v113 = vpack.c.bf16 %v65, %v65
    %v114 = vpack.c.bf16 %v66, %v66
    %v115 = vpack.c.bf16 %v67, %v67
    %v116 = vpack.c.bf16 %v68, %v68
    %v117 = vpack.c.bf16 %v69, %v69
    %v118 = vpack.c.bf16 %v70, %v70
    %v119 = vpack.c.bf16 %v71, %v71
    %v120 = vpack.c.bf16 %v72, %v72
    %v121 = vpack.c.bf16 %v73, %v73
    %v122 = vpack.c.bf16 %v74, %v74
    %v123 = vpack.c.bf16 %v75, %v75
    %v124 = vpack.c.bf16 %v76, %v76
    %v125 = vpack.c.bf16 %v77, %v77
    %v126 = vpack.c.bf16 %v78, %v78
    %v127 = vld [vmem:[#allocation5] sm:$0xff]
    %v128 = vld [vmem:[#allocation5 + $0x8] sm:$0xff]
    %v129 = vld [vmem:[#allocation5 + $0x10] sm:$0xff]
    %v130 = vld [vmem:[#allocation5 + $0x18] sm:$0xff]
    %v131 = vld [vmem:[#allocation5 + $0x20] sm:$0xff]
    %v132 = vld [vmem:[#allocation5 + $0x28] sm:$0xff]
    %v133 = vld [vmem:[#allocation5 + $0x30] sm:$0xff]
    %v134 = vld [vmem:[#allocation5 + $0x38] sm:$0xff]
    %v135 = vld [vmem:[#allocation5 + $0x40] sm:$0xff]
    %v136 = vld [vmem:[#allocation5 + $0x48] sm:$0xff]
    %v137 = vld [vmem:[#allocation5 + $0x50] sm:$0xff]
    %v138 = vld [vmem:[#allocation5 + $0x58] sm:$0xff]
    %v139 = vld [vmem:[#allocation5 + $0x60] sm:$0xff]
    %v140 = vld [vmem:[#allocation5 + $0x68] sm:$0xff]
    %v141 = vld [vmem:[#allocation5 + $0x70] sm:$0xff]
    %v142 = vld [vmem:[#allocation5 + $0x78] sm:$0xff]
    %v143 = vld [vmem:[#allocation5 + $0x80] sm:$0xff]
    %v144 = vld [vmem:[#allocation5 + $0x88] sm:$0xff]
    %v145 = vld [vmem:[#allocation5 + $0x90] sm:$0xff]
    %v146 = vld [vmem:[#allocation5 + $0x98] sm:$0xff]
    %v147 = vld [vmem:[#allocation5 + $0xa0] sm:$0xff]
    %v148 = vld [vmem:[#allocation5 + $0xa8] sm:$0xff]
    %v149 = vld [vmem:[#allocation5 + $0xb0] sm:$0xff]
    %v150 = vld [vmem:[#allocation5 + $0xb8] sm:$0xff]
    %v151 = vld [vmem:[#allocation5 + $0xc0] sm:$0xff]
    %v152 = vld [vmem:[#allocation5 + $0xc8] sm:$0xff]
    %v153 = vld [vmem:[#allocation5 + $0xd0] sm:$0xff]
    %v154 = vld [vmem:[#allocation5 + $0xd8] sm:$0xff]
    %v155 = vld [vmem:[#allocation5 + $0xe0] sm:$0xff]
    %v156 = vld [vmem:[#allocation5 + $0xe8] sm:$0xff]
    %v157 = vld [vmem:[#allocation5 + $0xf0] sm:$0xff]
    %v158 = vld [vmem:[#allocation5 + $0xf8] sm:$0xff]
    %v159 = vld [vmem:[#allocation5 + $0x100] sm:$0xff]
    %v160 = vld [vmem:[#allocation5 + $0x108] sm:$0xff]
    %v161 = vld [vmem:[#allocation5 + $0x110] sm:$0xff]
    %v162 = vld [vmem:[#allocation5 + $0x118] sm:$0xff]
    %v163 = vld [vmem:[#allocation5 + $0x120] sm:$0xff]
    %v164 = vld [vmem:[#allocation5 + $0x128] sm:$0xff]
    %v165 = vld [vmem:[#allocation5 + $0x130] sm:$0xff]
    %v166 = vld [vmem:[#allocation5 + $0x138] sm:$0xff]
    %v167 = vld [vmem:[#allocation5 + $0x140] sm:$0xff]
    %v168 = vld [vmem:[#allocation5 + $0x148] sm:$0xff]
    %v169 = vld [vmem:[#allocation5 + $0x150] sm:$0xff]
    %v170 = vld [vmem:[#allocation5 + $0x158] sm:$0xff]
    %v171 = vld [vmem:[#allocation5 + $0x160] sm:$0xff]
    %v172 = vld [vmem:[#allocation5 + $0x168] sm:$0xff]
    %v173 = vld [vmem:[#allocation5 + $0x170] sm:$0xff]
    %v174 = vld [vmem:[#allocation5 + $0x178] sm:$0xff]
    %v175 = vld [vmem:[#allocation5 + $0x180] sm:$0xff]
    %v176 = vld [vmem:[#allocation5 + $0x188] sm:$0xff]
    %v177 = vld [vmem:[#allocation5 + $0x190] sm:$0xff]
    %v178 = vld [vmem:[#allocation5 + $0x198] sm:$0xff]
    %v179 = vld [vmem:[#allocation5 + $0x1a0] sm:$0xff]
    %v180 = vld [vmem:[#allocation5 + $0x1a8] sm:$0xff]
    %v181 = vld [vmem:[#allocation5 + $0x1b0] sm:$0xff]
    %v182 = vld [vmem:[#allocation5 + $0x1b8] sm:$0xff]
    %v183 = vld [vmem:[#allocation5 + $0x1c0] sm:$0xff]
    %v184 = vld [vmem:[#allocation5 + $0x1c8] sm:$0xff]
    %v185 = vld [vmem:[#allocation5 + $0x1d0] sm:$0xff]
    %v186 = vld [vmem:[#allocation5 + $0x1d8] sm:$0xff]
    %v187 = vld [vmem:[#allocation5 + $0x1e0] sm:$0xff]
    %v188 = vld [vmem:[#allocation5 + $0x1e8] sm:$0xff]
    %v189 = vld [vmem:[#allocation5 + $0x1f0] sm:$0xff]
    %v190 = vld [vmem:[#allocation5 + $0x1f8] sm:$0xff]
    %v191 = vld [vmem:[#allocation5 + $0x200] sm:$0xff]
    %v192 = vld [vmem:[#allocation5 + $0x208] sm:$0xff]
    %v193 = vld [vmem:[#allocation5 + $0x210] sm:$0xff]
    %v194 = vld [vmem:[#allocation5 + $0x218] sm:$0xff]
    %v195 = vld [vmem:[#allocation5 + $0x220] sm:$0xff]
    %v196 = vld [vmem:[#allocation5 + $0x228] sm:$0xff]
    %v197 = vld [vmem:[#allocation5 + $0x230] sm:$0xff]
    %v198 = vld [vmem:[#allocation5 + $0x238] sm:$0xff]
    %v199 = vld [vmem:[#allocation5 + $0x240] sm:$0xff]
    %v200 = vld [vmem:[#allocation5 + $0x248] sm:$0xff]
    %v201 = vld [vmem:[#allocation5 + $0x250] sm:$0xff]
    %v202 = vld [vmem:[#allocation5 + $0x258] sm:$0xff]
    %v203 = vld [vmem:[#allocation5 + $0x260] sm:$0xff]
    %v204 = vld [vmem:[#allocation5 + $0x268] sm:$0xff]
    %v205 = vld [vmem:[#allocation5 + $0x270] sm:$0xff]
    %v206 = vld [vmem:[#allocation5 + $0x278] sm:$0xff]
    %v207 = vld [vmem:[#allocation5 + $0x280] sm:$0xff]
    %v208 = vld [vmem:[#allocation5 + $0x288] sm:$0xff]
    %v209 = vld [vmem:[#allocation5 + $0x290] sm:$0xff]
    %v210 = vld [vmem:[#allocation5 + $0x298] sm:$0xff]
    %v211 = vld [vmem:[#allocation5 + $0x2a0] sm:$0xff]
    %v212 = vld [vmem:[#allocation5 + $0x2a8] sm:$0xff]
    %v213 = vld [vmem:[#allocation5 + $0x2b0] sm:$0xff]
    %v214 = vld [vmem:[#allocation5 + $0x2b8] sm:$0xff]
    %v215 = vld [vmem:[#allocation5 + $0x2c0] sm:$0xff]
    %v216 = vld [vmem:[#allocation5 + $0x2c8] sm:$0xff]
    %v217 = vld [vmem:[#allocation5 + $0x2d0] sm:$0xff]
    %v218 = vld [vmem:[#allocation5 + $0x2d8] sm:$0xff]
    %v219 = vld [vmem:[#allocation5 + $0x2e0] sm:$0xff]
    %v220 = vld [vmem:[#allocation5 + $0x2e8] sm:$0xff]
    %v221 = vld [vmem:[#allocation5 + $0x2f0] sm:$0xff]
    %v222 = vld [vmem:[#allocation5 + $0x2f8] sm:$0xff]
    %v223 = vld [vmem:[%s2] sm:$0x1]
    %v320 = vunpack.c.l.b16 %v127
    %v321 = vunpack.c.h.b16 %v127
    %v322 = vunpack.c.l.b16 %v128
    %v323 = vunpack.c.h.b16 %v128
    %v324 = vunpack.c.l.b16 %v129
    %v325 = vunpack.c.h.b16 %v129
    %v326 = vunpack.c.l.b16 %v130
    %v327 = vunpack.c.h.b16 %v130
    %v328 = vunpack.c.l.b16 %v131
    %v329 = vunpack.c.h.b16 %v131
    %v330 = vunpack.c.l.b16 %v132
    %v331 = vunpack.c.h.b16 %v132
    %v332 = vunpack.c.l.b16 %v133
    %v333 = vunpack.c.h.b16 %v133
    %v334 = vunpack.c.l.b16 %v134
    %v335 = vunpack.c.h.b16 %v134
    %v336 = vunpack.c.l.b16 %v135
    %v337 = vunpack.c.h.b16 %v135
    %v338 = vunpack.c.l.b16 %v136
    %v339 = vunpack.c.h.b16 %v136
    %v340 = vunpack.c.l.b16 %v137
    %v341 = vunpack.c.h.b16 %v137
    %v342 = vunpack.c.l.b16 %v138
    %v343 = vunpack.c.h.b16 %v138
    %v344 = vunpack.c.l.b16 %v139
    %v345 = vunpack.c.h.b16 %v139
    %v346 = vunpack.c.l.b16 %v140
    %v347 = vunpack.c.h.b16 %v140
    %v348 = vunpack.c.l.b16 %v141
    %v349 = vunpack.c.h.b16 %v141
    %v350 = vunpack.c.l.b16 %v142
    %v351 = vunpack.c.h.b16 %v142
    %v352 = vunpack.c.l.b16 %v143
    %v353 = vunpack.c.h.b16 %v143
    %v354 = vunpack.c.l.b16 %v144
    %v355 = vunpack.c.h.b16 %v144
    %v356 = vunpack.c.l.b16 %v145
    %v357 = vunpack.c.h.b16 %v145
    %v358 = vunpack.c.l.b16 %v146
    %v359 = vunpack.c.h.b16 %v146
    %v360 = vunpack.c.l.b16 %v147
    %v361 = vunpack.c.h.b16 %v147
    %v362 = vunpack.c.l.b16 %v148
    %v363 = vunpack.c.h.b16 %v148
    %v364 = vunpack.c.l.b16 %v149
    %v365 = vunpack.c.h.b16 %v149
    %v366 = vunpack.c.l.b16 %v150
    %v367 = vunpack.c.h.b16 %v150
    %v368 = vunpack.c.l.b16 %v151
    %v369 = vunpack.c.h.b16 %v151
    %v370 = vunpack.c.l.b16 %v152
    %v371 = vunpack.c.h.b16 %v152
    %v372 = vunpack.c.l.b16 %v153
    %v373 = vunpack.c.h.b16 %v153
    %v374 = vunpack.c.l.b16 %v154
    %v375 = vunpack.c.h.b16 %v154
    %v376 = vunpack.c.l.b16 %v155
    %v377 = vunpack.c.h.b16 %v155
    %v378 = vunpack.c.l.b16 %v156
    %v379 = vunpack.c.h.b16 %v156
    %v380 = vunpack.c.l.b16 %v157
    %v381 = vunpack.c.h.b16 %v157
    %v382 = vunpack.c.l.b16 %v158
    %v383 = vunpack.c.h.b16 %v158
    %v384 = vunpack.c.l.b16 %v159
    %v385 = vunpack.c.h.b16 %v159
    %v386 = vunpack.c.l.b16 %v160
    %v387 = vunpack.c.h.b16 %v160
    %v388 = vunpack.c.l.b16 %v161
    %v389 = vunpack.c.h.b16 %v161
    %v390 = vunpack.c.l.b16 %v162
    %v391 = vunpack.c.h.b16 %v162
    %v392 = vunpack.c.l.b16 %v163
    %v393 = vunpack.c.h.b16 %v163
    %v394 = vunpack.c.l.b16 %v164
    %v395 = vunpack.c.h.b16 %v164
    %v396 = vunpack.c.l.b16 %v165
    %v397 = vunpack.c.h.b16 %v165
    %v398 = vunpack.c.l.b16 %v166
    %v399 = vunpack.c.h.b16 %v166
    %v400 = vunpack.c.l.b16 %v167
    %v401 = vunpack.c.h.b16 %v167
    %v402 = vunpack.c.l.b16 %v168
    %v403 = vunpack.c.h.b16 %v168
    %v404 = vunpack.c.l.b16 %v169
    %v405 = vunpack.c.h.b16 %v169
    %v406 = vunpack.c.l.b16 %v170
    %v407 = vunpack.c.h.b16 %v170
    %v408 = vunpack.c.l.b16 %v171
    %v409 = vunpack.c.h.b16 %v171
    %v410 = vunpack.c.l.b16 %v172
    %v411 = vunpack.c.h.b16 %v172
    %v412 = vunpack.c.l.b16 %v173
    %v413 = vunpack.c.h.b16 %v173
    %v414 = vunpack.c.l.b16 %v174
    %v415 = vunpack.c.h.b16 %v174
    %v416 = vunpack.c.l.b16 %v175
    %v417 = vunpack.c.h.b16 %v175
    %v418 = vunpack.c.l.b16 %v176
    %v419 = vunpack.c.h.b16 %v176
    %v420 = vunpack.c.l.b16 %v177
    %v421 = vunpack.c.h.b16 %v177
    %v422 = vunpack.c.l.b16 %v178
    %v423 = vunpack.c.h.b16 %v178
    %v424 = vunpack.c.l.b16 %v179
    %v425 = vunpack.c.h.b16 %v179
    %v426 = vunpack.c.l.b16 %v180
    %v427 = vunpack.c.h.b16 %v180
    %v428 = vunpack.c.l.b16 %v181
    %v429 = vunpack.c.h.b16 %v181
    %v430 = vunpack.c.l.b16 %v182
    %v431 = vunpack.c.h.b16 %v182
    %v432 = vunpack.c.l.b16 %v183
    %v433 = vunpack.c.h.b16 %v183
    %v434 = vunpack.c.l.b16 %v184
    %v435 = vunpack.c.h.b16 %v184
    %v436 = vunpack.c.l.b16 %v185
    %v437 = vunpack.c.h.b16 %v185
    %v438 = vunpack.c.l.b16 %v186
    %v439 = vunpack.c.h.b16 %v186
    %v440 = vunpack.c.l.b16 %v187
    %v441 = vunpack.c.h.b16 %v187
    %v442 = vunpack.c.l.b16 %v188
    %v443 = vunpack.c.h.b16 %v188
    %v444 = vunpack.c.l.b16 %v189
    %v445 = vunpack.c.h.b16 %v189
    %v446 = vunpack.c.l.b16 %v190
    %v447 = vunpack.c.h.b16 %v190
    %v448 = vunpack.c.l.b16 %v191
    %v449 = vunpack.c.h.b16 %v191
    %v450 = vunpack.c.l.b16 %v192
    %v451 = vunpack.c.h.b16 %v192
    %v452 = vunpack.c.l.b16 %v193
    %v453 = vunpack.c.h.b16 %v193
    %v454 = vunpack.c.l.b16 %v194
    %v455 = vunpack.c.h.b16 %v194
    %v456 = vunpack.c.l.b16 %v195
    %v457 = vunpack.c.h.b16 %v195
    %v458 = vunpack.c.l.b16 %v196
    %v459 = vunpack.c.h.b16 %v196
    %v460 = vunpack.c.l.b16 %v197
    %v461 = vunpack.c.h.b16 %v197
    %v462 = vunpack.c.l.b16 %v198
    %v463 = vunpack.c.h.b16 %v198
    %v464 = vunpack.c.l.b16 %v199
    %v465 = vunpack.c.h.b16 %v199
    %v466 = vunpack.c.l.b16 %v200
    %v467 = vunpack.c.h.b16 %v200
    %v468 = vunpack.c.l.b16 %v201
    %v469 = vunpack.c.h.b16 %v201
    %v470 = vunpack.c.l.b16 %v202
    %v471 = vunpack.c.h.b16 %v202
    %v472 = vunpack.c.l.b16 %v203
    %v473 = vunpack.c.h.b16 %v203
    %v474 = vunpack.c.l.b16 %v204
    %v475 = vunpack.c.h.b16 %v204
    %v476 = vunpack.c.l.b16 %v205
    %v477 = vunpack.c.h.b16 %v205
    %v478 = vunpack.c.l.b16 %v206
    %v479 = vunpack.c.h.b16 %v206
    %v480 = vunpack.c.l.b16 %v207
    %v481 = vunpack.c.h.b16 %v207
    %v482 = vunpack.c.l.b16 %v208
    %v483 = vunpack.c.h.b16 %v208
    %v484 = vunpack.c.l.b16 %v209
    %v485 = vunpack.c.h.b16 %v209
    %v486 = vunpack.c.l.b16 %v210
    %v487 = vunpack.c.h.b16 %v210
    %v488 = vunpack.c.l.b16 %v211
    %v489 = vunpack.c.h.b16 %v211
    %v490 = vunpack.c.l.b16 %v212
    %v491 = vunpack.c.h.b16 %v212
    %v492 = vunpack.c.l.b16 %v213
    %v493 = vunpack.c.h.b16 %v213
    %v494 = vunpack.c.l.b16 %v214
    %v495 = vunpack.c.h.b16 %v214
    %v496 = vunpack.c.l.b16 %v215
    %v497 = vunpack.c.h.b16 %v215
    %v498 = vunpack.c.l.b16 %v216
    %v499 = vunpack.c.h.b16 %v216
    %v500 = vunpack.c.l.b16 %v217
    %v501 = vunpack.c.h.b16 %v217
    %v502 = vunpack.c.l.b16 %v218
    %v503 = vunpack.c.h.b16 %v218
    %v504 = vunpack.c.l.b16 %v219
    %v505 = vunpack.c.h.b16 %v219
    %v506 = vunpack.c.l.b16 %v220
    %v507 = vunpack.c.h.b16 %v220
    %v508 = vunpack.c.l.b16 %v221
    %v509 = vunpack.c.h.b16 %v221
    %v510 = vunpack.c.l.b16 %v222
    %v511 = vunpack.c.h.b16 %v222
    %v512 = vpack.c.b16 %v344, %v320
    %v513 = vpack.c.b16 %v345, %v321
    %v514 = vpack.c.b16 %v346, %v322
    %v515 = vpack.c.b16 %v347, %v323
    %v516 = vpack.c.b16 %v348, %v324
    %v517 = vpack.c.b16 %v349, %v325
    %v518 = vpack.c.b16 %v350, %v326
    %v519 = vpack.c.b16 %v351, %v327
    %v520 = vpack.c.b16 %v352, %v328
    %v521 = vpack.c.b16 %v353, %v329
    %v522 = vpack.c.b16 %v354, %v330
    %v523 = vpack.c.b16 %v355, %v331
    %v524 = vpack.c.b16 %v356, %v332
    %v525 = vpack.c.b16 %v357, %v333
    %v526 = vpack.c.b16 %v358, %v334
    %v527 = vpack.c.b16 %v359, %v335
    %v528 = vpack.c.b16 %v360, %v336
    %v529 = vpack.c.b16 %v361, %v337
    %v530 = vpack.c.b16 %v362, %v338
    %v531 = vpack.c.b16 %v363, %v339
    %v532 = vpack.c.b16 %v364, %v340
    %v533 = vpack.c.b16 %v365, %v341
    %v534 = vpack.c.b16 %v366, %v342
    %v535 = vpack.c.b16 %v367, %v343
    %v536 = vpack.c.b16 %v392, %v368
    %v537 = vpack.c.b16 %v393, %v369
    %v538 = vpack.c.b16 %v394, %v370
    %v539 = vpack.c.b16 %v395, %v371
    %v540 = vpack.c.b16 %v396, %v372
    %v541 = vpack.c.b16 %v397, %v373
    %v542 = vpack.c.b16 %v398, %v374
    %v543 = vpack.c.b16 %v399, %v375
    %v544 = vpack.c.b16 %v400, %v376
    %v545 = vpack.c.b16 %v401, %v377
    %v546 = vpack.c.b16 %v402, %v378
    %v547 = vpack.c.b16 %v403, %v379
    %v548 = vpack.c.b16 %v404, %v380
    %v549 = vpack.c.b16 %v405, %v381
    %v550 = vpack.c.b16 %v406, %v382
    %v551 = vpack.c.b16 %v407, %v383
    %v552 = vpack.c.b16 %v408, %v384
    %v553 = vpack.c.b16 %v409, %v385
    %v554 = vpack.c.b16 %v410, %v386
    %v555 = vpack.c.b16 %v411, %v387
    %v556 = vpack.c.b16 %v412, %v388
    %v557 = vpack.c.b16 %v413, %v389
    %v558 = vpack.c.b16 %v414, %v390
    %v559 = vpack.c.b16 %v415, %v391
    %v560 = vpack.c.b16 %v440, %v416
    %v561 = vpack.c.b16 %v441, %v417
    %v562 = vpack.c.b16 %v442, %v418
    %v563 = vpack.c.b16 %v443, %v419
    %v564 = vpack.c.b16 %v444, %v420
    %v565 = vpack.c.b16 %v445, %v421
    %v566 = vpack.c.b16 %v446, %v422
    %v567 = vpack.c.b16 %v447, %v423
    %v568 = vpack.c.b16 %v448, %v424
    %v569 = vpack.c.b16 %v449, %v425
    %v570 = vpack.c.b16 %v450, %v426
    %v571 = vpack.c.b16 %v451, %v427
    %v572 = vpack.c.b16 %v452, %v428
    %v573 = vpack.c.b16 %v453, %v429
    %v574 = vpack.c.b16 %v454, %v430
    %v575 = vpack.c.b16 %v455, %v431
    %v576 = vpack.c.b16 %v456, %v432
    %v577 = vpack.c.b16 %v457, %v433
    %v578 = vpack.c.b16 %v458, %v434
    %v579 = vpack.c.b16 %v459, %v435
    %v580 = vpack.c.b16 %v460, %v436
    %v581 = vpack.c.b16 %v461, %v437
    %v582 = vpack.c.b16 %v462, %v438
    %v583 = vpack.c.b16 %v463, %v439
    %v584 = vpack.c.b16 %v488, %v464
    %v585 = vpack.c.b16 %v489, %v465
    %v586 = vpack.c.b16 %v490, %v466
    %v587 = vpack.c.b16 %v491, %v467
    %v588 = vpack.c.b16 %v492, %v468
    %v589 = vpack.c.b16 %v493, %v469
    %v590 = vpack.c.b16 %v494, %v470
    %v591 = vpack.c.b16 %v495, %v471
    %v592 = vpack.c.b16 %v496, %v472
    %v593 = vpack.c.b16 %v497, %v473
    %v594 = vpack.c.b16 %v498, %v474
    %v595 = vpack.c.b16 %v499, %v475
    %v596 = vpack.c.b16 %v500, %v476
    %v597 = vpack.c.b16 %v501, %v477
    %v598 = vpack.c.b16 %v502, %v478
    %v599 = vpack.c.b16 %v503, %v479
    %v600 = vpack.c.b16 %v504, %v480
    %v601 = vpack.c.b16 %v505, %v481
    %v602 = vpack.c.b16 %v506, %v482
    %v603 = vpack.c.b16 %v507, %v483
    %v604 = vpack.c.b16 %v508, %v484
    %v605 = vpack.c.b16 %v509, %v485
    %v606 = vpack.c.b16 %v510, %v486
    %v607 = vpack.c.b16 %v511, %v487
    %704 = vmatpush.bf16.xpose.msra.mxu0 0
    %705 = vmatpush.bf16.xpose.msra.mxu0 0
    %706 = vmatpush.bf16.xpose.msra.mxu0 0
    %707 = vmatpush.bf16.xpose.msra.mxu0 0
    %708 = vmatpush.bf16.xpose.msra.mxu0 %v584
    %709 = vmatpush.bf16.xpose.msra.mxu0 %v560
    %710 = vmatpush.bf16.xpose.msra.mxu0 %v536
    %711 = vmatpush.bf16.xpose.msra.mxu0 %v512
    %712 = vmatmul.bf16.gmra.mxu0 %v103
    %v713 = vpop.f32.mrf.mxu0
    %v714 = vadd.f32 %v223, %v713
    %v715 = vpop.f32.mrf.mxu0
    %716 = vdwg.mxu0
    %717 = vmatpush.bf16.xpose.msra.mxu0 0
    %718 = vmatpush.bf16.xpose.msra.mxu0 0
    %719 = vmatpush.bf16.xpose.msra.mxu0 0
    %720 = vmatpush.bf16.xpose.msra.mxu0 0
    %721 = vmatpush.bf16.xpose.msra.mxu0 %v585
    %722 = vmatpush.bf16.xpose.msra.mxu0 %v561
    %723 = vmatpush.bf16.xpose.msra.mxu0 %v537
    %724 = vmatpush.bf16.xpose.msra.mxu0 %v513
    %725 = vmatmul.bf16.gmra.mxu0 %v104
    %v726 = vpop.f32.mrf.mxu0
    %v727 = vadd.f32 %v714, %v726
    %v728 = vpop.f32.mrf.mxu0
    %729 = vdwg.mxu0
    %730 = vmatpush.bf16.xpose.msra.mxu0 0
    %731 = vmatpush.bf16.xpose.msra.mxu0 0
    %732 = vmatpush.bf16.xpose.msra.mxu0 0
    %733 = vmatpush.bf16.xpose.msra.mxu0 0
    %734 = vmatpush.bf16.xpose.msra.mxu0 %v586
    %735 = vmatpush.bf16.xpose.msra.mxu0 %v562
    %736 = vmatpush.bf16.xpose.msra.mxu0 %v538
    %737 = vmatpush.bf16.xpose.msra.mxu0 %v514
    %738 = vmatmul.bf16.gmra.mxu0 %v105
    %v739 = vpop.f32.mrf.mxu0
    %v740 = vadd.f32 %v727, %v739
    %v741 = vpop.f32.mrf.mxu0
    %742 = vdwg.mxu0
    %743 = vmatpush.bf16.xpose.msra.mxu0 0
    %744 = vmatpush.bf16.xpose.msra.mxu0 0
    %745 = vmatpush.bf16.xpose.msra.mxu0 0
    %746 = vmatpush.bf16.xpose.msra.mxu0 0
    %747 = vmatpush.bf16.xpose.msra.mxu0 %v587
    %748 = vmatpush.bf16.xpose.msra.mxu0 %v563
    %749 = vmatpush.bf16.xpose.msra.mxu0 %v539
    %750 = vmatpush.bf16.xpose.msra.mxu0 %v515
    %751 = vmatmul.bf16.gmra.mxu0 %v106
    %v752 = vpop.f32.mrf.mxu0
    %v753 = vadd.f32 %v740, %v752
    %v754 = vpop.f32.mrf.mxu0
    %755 = vdwg.mxu0
    %756 = vmatpush.bf16.xpose.msra.mxu0 0
    %757 = vmatpush.bf16.xpose.msra.mxu0 0
    %758 = vmatpush.bf16.xpose.msra.mxu0 0
    %759 = vmatpush.bf16.xpose.msra.mxu0 0
    %760 = vmatpush.bf16.xpose.msra.mxu0 %v588
    %761 = vmatpush.bf16.xpose.msra.mxu0 %v564
    %762 = vmatpush.bf16.xpose.msra.mxu0 %v540
    %763 = vmatpush.bf16.xpose.msra.mxu0 %v516
    %764 = vmatmul.bf16.gmra.mxu0 %v107
    %v765 = vpop.f32.mrf.mxu0
    %v766 = vadd.f32 %v753, %v765
    %v767 = vpop.f32.mrf.mxu0
    %768 = vdwg.mxu0
    %769 = vmatpush.bf16.xpose.msra.mxu0 0
    %770 = vmatpush.bf16.xpose.msra.mxu0 0
    %771 = vmatpush.bf16.xpose.msra.mxu0 0
    %772 = vmatpush.bf16.xpose.msra.mxu0 0
    %773 = vmatpush.bf16.xpose.msra.mxu0 %v589
    %774 = vmatpush.bf16.xpose.msra.mxu0 %v565
    %775 = vmatpush.bf16.xpose.msra.mxu0 %v541
    %776 = vmatpush.bf16.xpose.msra.mxu0 %v517
    %777 = vmatmul.bf16.gmra.mxu0 %v108
    %v778 = vpop.f32.mrf.mxu0
    %v779 = vadd.f32 %v766, %v778
    %v780 = vpop.f32.mrf.mxu0
    %781 = vdwg.mxu0
    %782 = vmatpush.bf16.xpose.msra.mxu0 0
    %783 = vmatpush.bf16.xpose.msra.mxu0 0
    %784 = vmatpush.bf16.xpose.msra.mxu0 0
    %785 = vmatpush.bf16.xpose.msra.mxu0 0
    %786 = vmatpush.bf16.xpose.msra.mxu0 %v590
    %787 = vmatpush.bf16.xpose.msra.mxu0 %v566
    %788 = vmatpush.bf16.xpose.msra.mxu0 %v542
    %789 = vmatpush.bf16.xpose.msra.mxu0 %v518
    %790 = vmatmul.bf16.gmra.mxu0 %v109
    %v791 = vpop.f32.mrf.mxu0
    %v792 = vadd.f32 %v779, %v791
    %v793 = vpop.f32.mrf.mxu0
    %794 = vdwg.mxu0
    %795 = vmatpush.bf16.xpose.msra.mxu0 0
    %796 = vmatpush.bf16.xpose.msra.mxu0 0
    %797 = vmatpush.bf16.xpose.msra.mxu0 0
    %798 = vmatpush.bf16.xpose.msra.mxu0 0
    %799 = vmatpush.bf16.xpose.msra.mxu0 %v591
    %800 = vmatpush.bf16.xpose.msra.mxu0 %v567
    %801 = vmatpush.bf16.xpose.msra.mxu0 %v543
    %802 = vmatpush.bf16.xpose.msra.mxu0 %v519
    %803 = vmatmul.bf16.gmra.mxu0 %v110
    %v804 = vpop.f32.mrf.mxu0
    %v805 = vadd.f32 %v792, %v804
    %v806 = vpop.f32.mrf.mxu0
    %807 = vdwg.mxu0
    %808 = vmatpush.bf16.xpose.msra.mxu0 0
    %809 = vmatpush.bf16.xpose.msra.mxu0 0
    %810 = vmatpush.bf16.xpose.msra.mxu0 0
    %811 = vmatpush.bf16.xpose.msra.mxu0 0
    %812 = vmatpush.bf16.xpose.msra.mxu0 %v592
    %813 = vmatpush.bf16.xpose.msra.mxu0 %v568
    %814 = vmatpush.bf16.xpose.msra.mxu0 %v544
    %815 = vmatpush.bf16.xpose.msra.mxu0 %v520
    %816 = vmatmul.bf16.gmra.mxu0 %v111
    %v817 = vpop.f32.mrf.mxu0
    %v818 = vadd.f32 %v805, %v817
    %v819 = vpop.f32.mrf.mxu0
    %820 = vdwg.mxu0
    %821 = vmatpush.bf16.xpose.msra.mxu0 0
    %822 = vmatpush.bf16.xpose.msra.mxu0 0
    %823 = vmatpush.bf16.xpose.msra.mxu0 0
    %824 = vmatpush.bf16.xpose.msra.mxu0 0
    %825 = vmatpush.bf16.xpose.msra.mxu0 %v593
    %826 = vmatpush.bf16.xpose.msra.mxu0 %v569
    %827 = vmatpush.bf16.xpose.msra.mxu0 %v545
    %828 = vmatpush.bf16.xpose.msra.mxu0 %v521
    %829 = vmatmul.bf16.gmra.mxu0 %v112
    %v830 = vpop.f32.mrf.mxu0
    %v831 = vadd.f32 %v818, %v830
    %v832 = vpop.f32.mrf.mxu0
    %833 = vdwg.mxu0
    %834 = vmatpush.bf16.xpose.msra.mxu0 0
    %835 = vmatpush.bf16.xpose.msra.mxu0 0
    %836 = vmatpush.bf16.xpose.msra.mxu0 0
    %837 = vmatpush.bf16.xpose.msra.mxu0 0
    %838 = vmatpush.bf16.xpose.msra.mxu0 %v594
    %839 = vmatpush.bf16.xpose.msra.mxu0 %v570
    %840 = vmatpush.bf16.xpose.msra.mxu0 %v546
    %841 = vmatpush.bf16.xpose.msra.mxu0 %v522
    %842 = vmatmul.bf16.gmra.mxu0 %v113
    %v843 = vpop.f32.mrf.mxu0
    %v844 = vadd.f32 %v831, %v843
    %v845 = vpop.f32.mrf.mxu0
    %846 = vdwg.mxu0
    %847 = vmatpush.bf16.xpose.msra.mxu0 0
    %848 = vmatpush.bf16.xpose.msra.mxu0 0
    %849 = vmatpush.bf16.xpose.msra.mxu0 0
    %850 = vmatpush.bf16.xpose.msra.mxu0 0
    %851 = vmatpush.bf16.xpose.msra.mxu0 %v595
    %852 = vmatpush.bf16.xpose.msra.mxu0 %v571
    %853 = vmatpush.bf16.xpose.msra.mxu0 %v547
    %854 = vmatpush.bf16.xpose.msra.mxu0 %v523
    %855 = vmatmul.bf16.gmra.mxu0 %v114
    %v856 = vpop.f32.mrf.mxu0
    %v857 = vadd.f32 %v844, %v856
    %v858 = vpop.f32.mrf.mxu0
    %859 = vdwg.mxu0
    %860 = vmatpush.bf16.xpose.msra.mxu0 0
    %861 = vmatpush.bf16.xpose.msra.mxu0 0
    %862 = vmatpush.bf16.xpose.msra.mxu0 0
    %863 = vmatpush.bf16.xpose.msra.mxu0 0
    %864 = vmatpush.bf16.xpose.msra.mxu0 %v596
    %865 = vmatpush.bf16.xpose.msra.mxu0 %v572
    %866 = vmatpush.bf16.xpose.msra.mxu0 %v548
    %867 = vmatpush.bf16.xpose.msra.mxu0 %v524
    %868 = vmatmul.bf16.gmra.mxu0 %v115
    %v869 = vpop.f32.mrf.mxu0
    %v870 = vadd.f32 %v857, %v869
    %v871 = vpop.f32.mrf.mxu0
    %872 = vdwg.mxu0
    %873 = vmatpush.bf16.xpose.msra.mxu0 0
    %874 = vmatpush.bf16.xpose.msra.mxu0 0
    %875 = vmatpush.bf16.xpose.msra.mxu0 0
    %876 = vmatpush.bf16.xpose.msra.mxu0 0
    %877 = vmatpush.bf16.xpose.msra.mxu0 %v597
    %878 = vmatpush.bf16.xpose.msra.mxu0 %v573
    %879 = vmatpush.bf16.xpose.msra.mxu0 %v549
    %880 = vmatpush.bf16.xpose.msra.mxu0 %v525
    %881 = vmatmul.bf16.gmra.mxu0 %v116
    %v882 = vpop.f32.mrf.mxu0
    %v883 = vadd.f32 %v870, %v882
    %v884 = vpop.f32.mrf.mxu0
    %885 = vdwg.mxu0
    %886 = vmatpush.bf16.xpose.msra.mxu0 0
    %887 = vmatpush.bf16.xpose.msra.mxu0 0
    %888 = vmatpush.bf16.xpose.msra.mxu0 0
    %889 = vmatpush.bf16.xpose.msra.mxu0 0
    %890 = vmatpush.bf16.xpose.msra.mxu0 %v598
    %891 = vmatpush.bf16.xpose.msra.mxu0 %v574
    %892 = vmatpush.bf16.xpose.msra.mxu0 %v550
    %893 = vmatpush.bf16.xpose.msra.mxu0 %v526
    %894 = vmatmul.bf16.gmra.mxu0 %v117
    %v895 = vpop.f32.mrf.mxu0
    %v896 = vadd.f32 %v883, %v895
    %v897 = vpop.f32.mrf.mxu0
    %898 = vdwg.mxu0
    %899 = vmatpush.bf16.xpose.msra.mxu0 0
    %900 = vmatpush.bf16.xpose.msra.mxu0 0
    %901 = vmatpush.bf16.xpose.msra.mxu0 0
    %902 = vmatpush.bf16.xpose.msra.mxu0 0
    %903 = vmatpush.bf16.xpose.msra.mxu0 %v599
    %904 = vmatpush.bf16.xpose.msra.mxu0 %v575
    %905 = vmatpush.bf16.xpose.msra.mxu0 %v551
    %906 = vmatpush.bf16.xpose.msra.mxu0 %v527
    %907 = vmatmul.bf16.gmra.mxu0 %v118
    %v908 = vpop.f32.mrf.mxu0
    %v909 = vadd.f32 %v896, %v908
    %v910 = vpop.f32.mrf.mxu0
    %911 = vdwg.mxu0
    %912 = vmatpush.bf16.xpose.msra.mxu0 0
    %913 = vmatpush.bf16.xpose.msra.mxu0 0
    %914 = vmatpush.bf16.xpose.msra.mxu0 0
    %915 = vmatpush.bf16.xpose.msra.mxu0 0
    %916 = vmatpush.bf16.xpose.msra.mxu0 %v600
    %917 = vmatpush.bf16.xpose.msra.mxu0 %v576
    %918 = vmatpush.bf16.xpose.msra.mxu0 %v552
    %919 = vmatpush.bf16.xpose.msra.mxu0 %v528
    %920 = vmatmul.bf16.gmra.mxu0 %v119
    %v921 = vpop.f32.mrf.mxu0
    %v922 = vadd.f32 %v909, %v921
    %v923 = vpop.f32.mrf.mxu0
    %924 = vdwg.mxu0
    %925 = vmatpush.bf16.xpose.msra.mxu0 0
    %926 = vmatpush.bf16.xpose.msra.mxu0 0
    %927 = vmatpush.bf16.xpose.msra.mxu0 0
    %928 = vmatpush.bf16.xpose.msra.mxu0 0
    %929 = vmatpush.bf16.xpose.msra.mxu0 %v601
    %930 = vmatpush.bf16.xpose.msra.mxu0 %v577
    %931 = vmatpush.bf16.xpose.msra.mxu0 %v553
    %932 = vmatpush.bf16.xpose.msra.mxu0 %v529
    %933 = vmatmul.bf16.gmra.mxu0 %v120
    %v934 = vpop.f32.mrf.mxu0
    %v935 = vadd.f32 %v922, %v934
    %v936 = vpop.f32.mrf.mxu0
    %937 = vdwg.mxu0
    %938 = vmatpush.bf16.xpose.msra.mxu0 0
    %939 = vmatpush.bf16.xpose.msra.mxu0 0
    %940 = vmatpush.bf16.xpose.msra.mxu0 0
    %941 = vmatpush.bf16.xpose.msra.mxu0 0
    %942 = vmatpush.bf16.xpose.msra.mxu0 %v602
    %943 = vmatpush.bf16.xpose.msra.mxu0 %v578
    %944 = vmatpush.bf16.xpose.msra.mxu0 %v554
    %945 = vmatpush.bf16.xpose.msra.mxu0 %v530
    %946 = vmatmul.bf16.gmra.mxu0 %v121
    %v947 = vpop.f32.mrf.mxu0
    %v948 = vadd.f32 %v935, %v947
    %v949 = vpop.f32.mrf.mxu0
    %950 = vdwg.mxu0
    %951 = vmatpush.bf16.xpose.msra.mxu0 0
    %952 = vmatpush.bf16.xpose.msra.mxu0 0
    %953 = vmatpush.bf16.xpose.msra.mxu0 0
    %954 = vmatpush.bf16.xpose.msra.mxu0 0
    %955 = vmatpush.bf16.xpose.msra.mxu0 %v603
    %956 = vmatpush.bf16.xpose.msra.mxu0 %v579
    %957 = vmatpush.bf16.xpose.msra.mxu0 %v555
    %958 = vmatpush.bf16.xpose.msra.mxu0 %v531
    %959 = vmatmul.bf16.gmra.mxu0 %v122
    %v960 = vpop.f32.mrf.mxu0
    %v961 = vadd.f32 %v948, %v960
    %v962 = vpop.f32.mrf.mxu0
    %963 = vdwg.mxu0
    %964 = vmatpush.bf16.xpose.msra.mxu0 0
    %965 = vmatpush.bf16.xpose.msra.mxu0 0
    %966 = vmatpush.bf16.xpose.msra.mxu0 0
    %967 = vmatpush.bf16.xpose.msra.mxu0 0
    %968 = vmatpush.bf16.xpose.msra.mxu0 %v604
    %969 = vmatpush.bf16.xpose.msra.mxu0 %v580
    %970 = vmatpush.bf16.xpose.msra.mxu0 %v556
    %971 = vmatpush.bf16.xpose.msra.mxu0 %v532
    %972 = vmatmul.bf16.gmra.mxu0 %v123
    %v973 = vpop.f32.mrf.mxu0
    %v974 = vadd.f32 %v961, %v973
    %v975 = vpop.f32.mrf.mxu0
    %976 = vdwg.mxu0
    %977 = vmatpush.bf16.xpose.msra.mxu0 0
    %978 = vmatpush.bf16.xpose.msra.mxu0 0
    %979 = vmatpush.bf16.xpose.msra.mxu0 0
    %980 = vmatpush.bf16.xpose.msra.mxu0 0
    %981 = vmatpush.bf16.xpose.msra.mxu0 %v605
    %982 = vmatpush.bf16.xpose.msra.mxu0 %v581
    %983 = vmatpush.bf16.xpose.msra.mxu0 %v557
    %984 = vmatpush.bf16.xpose.msra.mxu0 %v533
    %985 = vmatmul.bf16.gmra.mxu0 %v124
    %v986 = vpop.f32.mrf.mxu0
    %v987 = vadd.f32 %v974, %v986
    %v988 = vpop.f32.mrf.mxu0
    %989 = vdwg.mxu0
    %990 = vmatpush.bf16.xpose.msra.mxu0 0
    %991 = vmatpush.bf16.xpose.msra.mxu0 0
    %992 = vmatpush.bf16.xpose.msra.mxu0 0
    %993 = vmatpush.bf16.xpose.msra.mxu0 0
    %994 = vmatpush.bf16.xpose.msra.mxu0 %v606
    %995 = vmatpush.bf16.xpose.msra.mxu0 %v582
    %996 = vmatpush.bf16.xpose.msra.mxu0 %v558
    %997 = vmatpush.bf16.xpose.msra.mxu0 %v534
    %998 = vmatmul.bf16.gmra.mxu0 %v125
    %v999 = vpop.f32.mrf.mxu0
    %v1000 = vadd.f32 %v987, %v999
    %v1001 = vpop.f32.mrf.mxu0
    %1002 = vdwg.mxu0
    %1003 = vmatpush.bf16.xpose.msra.mxu0 0
    %1004 = vmatpush.bf16.xpose.msra.mxu0 0
    %1005 = vmatpush.bf16.xpose.msra.mxu0 0
    %1006 = vmatpush.bf16.xpose.msra.mxu0 0
    %1007 = vmatpush.bf16.xpose.msra.mxu0 %v607
    %1008 = vmatpush.bf16.xpose.msra.mxu0 %v583
    %1009 = vmatpush.bf16.xpose.msra.mxu0 %v559
    %1010 = vmatpush.bf16.xpose.msra.mxu0 %v535
    %1011 = vmatmul.bf16.gmra.mxu0 %v126
    %v1012 = vpop.f32.mrf.mxu0
    %v1013 = vadd.f32 %v1000, %v1012
    %v1014 = vpop.f32.mrf.mxu0
    %1015 = vdwg.mxu0
    %v1016 = vld [vmem:[%s3] sm:$0x1]
    %v1017 = vadd.f32 %v1013, %v1016
    %vm1018 = vcmask 516096
    %1019 = vst.msk [vmem:[#allocation7] sm:$0x1] %vm1018, %v1017
    // Predicated region
    $region26: #{tpu_custom_call.1} parent=1 // pred_check
      _
    $region27: #{tpu_custom_call.1} parent=1 // pred_check_branch
      %1021 = sbr.rel (0) target = $region29
    $region28: #{tpu_custom_call.1} parent=1 // pred_region
      %1023 = vsyncadd [#allocation4], 0
      %s1025 = sshll.u32 [#allocation7], 4
      %s1026 = int_to_ptr.vmem [resolvable:$true] %s1025
      %s1027 = sshll.u32 %s4, 4
      %s1028 = int_to_ptr.hbm [resolvable:$true] %s1027
      %1030 = dma.vmem_to_hbm [thread:$0]  %s1026, 16, %s1028, [#allocation4]
    $region29: #{tpu_custom_call.1} parent=1 // pred_fallthru
      _
    // Predicated region
    $region30: #{tpu_custom_call.1} parent=1 // pred_check
      _
    $region31: #{tpu_custom_call.1} parent=1 // pred_check_branch
      %1032 = sbr.rel (0) target = $region33
    $region32: #{tpu_custom_call.1} parent=1 // pred_region
      %1034 = dma.done [#allocation4], 16
    $region33: #{tpu_custom_call.1} parent=1 // pred_fallthru
      _
    %1035 = vsyncpa [#allocation3], 1
    %1036 = vsyncpa [#allocation6], 1
    %1037 = vsyncpa [#allocation4], 1

</llo_original>
